<compile_context>
chip_gen: v6e
topology: v6e:2x2x1
jax: 0.10.0
libtpu: 0.0.40
codegen_flags: <defaults>
</compile_context>

<pallas_src>
import functools

import jax
import jax.numpy as jnp
from jax.experimental import pallas as pl
from jax.experimental.pallas import tpu as pltpu

LANE = 128
MAX_TILE_ROWS = 8192   # 8192 * 128 * 4B = 4 MiB per f32 input block
MIN_BLOCKS = 4         # keep several grid steps so v7x's 2 TCs both get work


def _dice_partial_kernel(yt_ref, yp_ref, out_ref, *, valid_rows: int,
                         tile_rows: int):
    # Widen to f32 in-kernel (inputs may be int8/bf16/f32).
    yt = yt_ref[...].astype(jnp.float32)
    yp = yp_ref[...].astype(jnp.float32)

    def reduce_and_store(t, p):
        prod = t * p   # numerator partial (intersection)
        both = t + p   # fused denominator partial (sum_true + sum_pred)
        if tile_rows % 8 == 0:
            # Pure-VPU vreg accumulation: (T,128) -> (T//8, 8, 128), add axis 0.
            out_ref[0] = jnp.sum(prod.reshape(tile_rows // 8, 8, LANE), axis=0)
            out_ref[1] = jnp.sum(both.reshape(tile_rows // 8, 8, LANE), axis=0)
        else:
            # Tiny-input fallback (rows < 8): single sublane reduce to (1,128).
            out_ref[0] = jnp.sum(prod, axis=0, keepdims=True)
            out_ref[1] = jnp.sum(both, axis=0, keepdims=True)

    # Steady-state blocks: no masking work at all.
    reduce_and_store(yt, yp)

    if valid_rows % tile_rows != 0:
        # Only the last grid block can contain undefined rows past the array
        # extent; recompute its partials with a row mask and overwrite.
        @pl.when(pl.program_id(0) == pl.num_programs(0) - 1)
        def _():
            row0 = pl.program_id(0) * tile_rows
            ridx = row0 + jax.lax.broadcasted_iota(
                jnp.int32, (tile_rows, LANE), 0)
            keep = ridx < valid_rows
            reduce_and_store(jnp.where(keep, yt, 0.0),
                             jnp.where(keep, yp, 0.0))


def _as_flat(x: jax.Array) -> jax.Array:
    """Flatten, keeping the narrowest dtype that streams cleanly from HBM."""
    x = jnp.ravel(x)
    if x.dtype == jnp.bool_:
        return x.astype(jnp.int8)          # 1 B/elem; widened to f32 in-kernel
    if jnp.issubdtype(x.dtype, jnp.integer) and x.dtype.itemsize > 4:
        return x.astype(jnp.int32)
    return x


def _row_granularity(*dtypes) -> int:
    """Min second-to-last-dim multiple so blocks satisfy the dtype tiling."""
    g = 8
    for dt in dtypes:
        g = max(g, 32 // jnp.dtype(dt).itemsize)   # f32->8, bf16->16, int8->32
    return g


def dice(y_true: jax.Array, y_pred: jax.Array, smooth: float = 1e-05) -> jax.Array:
    """Scalar soft-Dice coefficient, matching the PyTorch module."""
    yt = _as_flat(y_true)
    yp = _as_flat(y_pred)
    n = yt.shape[0]
    if n == 0:
        return jnp.float32(1.0)   # (0 + smooth) / (0 + smooth)

    rows = n // LANE
    rem = n % LANE

    inter = jnp.float32(0.0)
    denom = jnp.float32(0.0)

    if rem:
        # Ragged tail (< 128 elements): fold in with plain JAX -- no full-array pad.
        t_tail = yt[rows * LANE:].astype(jnp.float32)
        p_tail = yp[rows * LANE:].astype(jnp.float32)
        inter = inter + jnp.sum(t_tail * p_tail)
        denom = denom + jnp.sum(t_tail) + jnp.sum(p_tail)

    if rows > 0:
        # Common case (rem == 0): copy-free row-major reshape. Ragged case: a
        # prefix slice (rare; still cheaper than padding both arrays).
        yt2 = (yt if rem == 0 else yt[: rows * LANE]).reshape(rows, LANE)
        yp2 = (yp if rem == 0 else yp[: rows * LANE]).reshape(rows, LANE)

        gran = _row_granularity(yt2.dtype, yp2.dtype)
        if rows >= gran:
            # Aim for >= MIN_BLOCKS grid steps (v7x 2-TC split), capped by VMEM.
            target = (pl.cdiv(rows, MIN_BLOCKS) // gran) * gran
            tile_rows = min(MAX_TILE_ROWS, max(gran, target))
        else:
            tile_rows = rows   # block == full extent (always a legal block shape)
        num_blocks = pl.cdiv(rows, tile_rows)
        sub = 8 if tile_rows % 8 == 0 else 1

        kernel = functools.partial(
            _dice_partial_kernel, valid_rows=rows, tile_rows=tile_rows)

        out_bytes = num_blocks * 2 * sub * LANE * 4
        cost = pl.CostEstimate(
            flops=4 * rows * LANE,
            transcendentals=0,
            bytes_accessed=(yt2.size * yt2.dtype.itemsize
                            + yp2.size * yp2.dtype.itemsize + out_bytes))

        partials = pl.pallas_call(
            kernel,
            out_shape=jax.ShapeDtypeStruct((num_blocks, 2, sub, LANE),
                                           jnp.float32),
            grid_spec=pltpu.PrefetchScalarGridSpec(
                num_scalar_prefetch=0,
                grid=(num_blocks,),
                in_specs=[
                    pl.BlockSpec((tile_rows, LANE), lambda i: (i, 0)),
                    pl.BlockSpec((tile_rows, LANE), lambda i: (i, 0)),
                ],
                out_specs=pl.BlockSpec((None, 2, sub, LANE),
                                       lambda i: (i, 0, 0, 0)),
            ),
            compiler_params=pltpu.CompilerParams(
                dimension_semantics=("parallel",),
                vmem_limit_bytes=32 * 1024 * 1024,
            ),
            cost_estimate=cost,
        )(yt2, yp2)

        # Single fused reduction over (blocks, sublanes, lanes) -> (2,)
        sums = jnp.sum(partials, axis=(0, 2, 3))
        inter = inter + sums[0]
        denom = denom + sums[1]

    sm = jnp.float32(smooth)
    return (jnp.float32(2.0) * inter + sm) / (denom + sm)


if __name__ == "__main__":
    key = jax.random.PRNGKey(0)
    k1, k2, k3, k4 = jax.random.split(key, 4)

    # Case 1: typical segmentation shapes, NCHW (2, 4, 16, 16), both f32.
    shape = (2, 4, 16, 16)
    y_true = (jax.random.uniform(k1, shape) > 0.5).astype(jnp.float32)
    y_pred = jax.random.uniform(k2, shape).astype(jnp.float32)
    result = dice(y_true, y_pred)
    jax.block_until_ready(result)
    yt_r = jnp.ravel(y_true)
    yp_r = jnp.ravel(y_pred)
    ref = (2.0 * jnp.sum(yt_r * yp_r) + 1e-05) / (
        jnp.sum(yt_r) + jnp.sum(yp_r) + 1e-05)
    assert jnp.allclose(result, ref, rtol=1e-5, atol=1e-6), (result, ref)

    # Case 2: boolean mask streamed natively (int8 path), f32 predictions.
    shape2 = (2, 4, 32, 32)
    y_true_b = jax.random.uniform(k3, shape2) > 0.5
    y_pred_b = jax.random.uniform(k4, shape2).astype(jnp.float32)
    result2 = dice(y_true_b, y_pred_b)
    jax.block_until_ready(result2)
    ytb = jnp.ravel(y_true_b).astype(jnp.float32)
    ypb = jnp.ravel(y_pred_b)
    ref2 = (2.0 * jnp.sum(ytb * ypb) + 1e-05) / (
        jnp.sum(ytb) + jnp.sum(ypb) + 1e-05)
    assert jnp.allclose(result2, ref2, rtol=1e-5, atol=1e-6), (result2, ref2)

    print("KERNEL_OK")
</pallas_src>

<mosaic_0001>
module attributes {stable_mosaic.version = 11 : i64} {
  func.func @_dice_partial_kernel(%arg0: i32, %arg1: memref<8x128xf32, #tpu.memory_space<vmem>>, %arg2: memref<8x128xf32, #tpu.memory_space<vmem>>, %arg3: memref<1x2x8x128xf32, #tpu.memory_space<vmem>>) attributes {dimension_semantics = [#tpu.dimension_semantics<parallel>], iteration_bounds = array<i64: 2>, scalar_prefetch = 0 : i64, scratch_operands = 0 : i64, tpu.core_type = #tpu.core_type<tc>, window_params = [{transform_indices = @transform_0, window_bounds = array<i64: 8, 128>}, {transform_indices = @transform_1, window_bounds = array<i64: 8, 128>}, {transform_indices = @transform_2, window_bounds = array<i64: 1, 2, 8, 128>}]} {
    %c0 = arith.constant 0 : index
    %c0_0 = arith.constant 0 : index
    %0 = vector.load %arg1[%c0, %c0_0] : memref<8x128xf32, #tpu.memory_space<vmem>>, vector<8x128xf32>
    %c0_1 = arith.constant 0 : index
    %c0_2 = arith.constant 0 : index
    %1 = vector.load %arg2[%c0_1, %c0_2] : memref<8x128xf32, #tpu.memory_space<vmem>>, vector<8x128xf32>
    %2 = arith.mulf %0, %1 : vector<8x128xf32>
    %3 = arith.addf %0, %1 : vector<8x128xf32>
    %4 = vector.shape_cast %2 : vector<8x128xf32> to vector<1x8x128xf32>
    %cst = arith.constant dense<0.000000e+00> : vector<8x128xf32>
    %5 = vector.multi_reduction <add>, %4, %cst [0] : vector<1x8x128xf32> to vector<8x128xf32>
    %c0_3 = arith.constant 0 : index
    %c0_4 = arith.constant 0 : index
    %c0_5 = arith.constant 0 : index
    %c0_6 = arith.constant 0 : index
    %6 = vector.load %arg3[%c0_3, %c0_4, %c0_5, %c0_6] : memref<1x2x8x128xf32, #tpu.memory_space<vmem>>, vector<1x1x8x128xf32>
    %7 = vector.shape_cast %6 : vector<1x1x8x128xf32> to vector<8x128xf32>
    %8 = vector.shape_cast %5 : vector<8x128xf32> to vector<1x1x8x128xf32>
    tpu.vector_store %arg3[%c0_3, %c0_4, %c0_5, %c0_6], %8 {strides = array<i32>} : memref<1x2x8x128xf32, #tpu.memory_space<vmem>>, vector<1x1x8x128xf32>,
    %9 = vector.shape_cast %3 : vector<8x128xf32> to vector<1x8x128xf32>
    %cst_7 = arith.constant dense<0.000000e+00> : vector<8x128xf32>
    %10 = vector.multi_reduction <add>, %9, %cst_7 [0] : vector<1x8x128xf32> to vector<8x128xf32>
    %c0_8 = arith.constant 0 : index
    %c1 = arith.constant 1 : index
    %c0_9 = arith.constant 0 : index
    %c0_10 = arith.constant 0 : index
    %11 = vector.load %arg3[%c0_8, %c1, %c0_9, %c0_10] : memref<1x2x8x128xf32, #tpu.memory_space<vmem>>, vector<1x1x8x128xf32>
    %12 = vector.shape_cast %11 : vector<1x1x8x128xf32> to vector<8x128xf32>
    %13 = vector.shape_cast %10 : vector<8x128xf32> to vector<1x1x8x128xf32>
    tpu.vector_store %arg3[%c0_8, %c1, %c0_9, %c0_10], %13 {strides = array<i32>} : memref<1x2x8x128xf32, #tpu.memory_space<vmem>>, vector<1x1x8x128xf32>,
    return
  }
  func.func @transform_0(%arg0: i32) -> (i32, i32) {
    %c0_i32 = arith.constant 0 : i32
    %c0_i32_0 = arith.constant 0 : i32
    return %arg0, %c0_i32 : i32, i32
  }
  func.func @transform_1(%arg0: i32) -> (i32, i32) {
    %c0_i32 = arith.constant 0 : i32
    %c0_i32_0 = arith.constant 0 : i32
    return %arg0, %c0_i32 : i32, i32
  }
  func.func @transform_2(%arg0: i32) -> (i32, i32, i32, i32) {
    %c0_i32 = arith.constant 0 : i32
    %c0_i32_0 = arith.constant 0 : i32
    %c0_i32_1 = arith.constant 0 : i32
    %c0_i32_2 = arith.constant 0 : i32
    return %arg0, %c0_i32, %c0_i32_0, %c0_i32_1 : i32, i32, i32, i32
  }
}

</mosaic_0001>

<llo_original>
// kernel: tpu_custom_call.1
$region0: #{tpu_custom_call.1}
  #allocation0 [shape = 'u32[]', space=smem, size = 0x4, offset = 0x4, fixed_abs, tag = 'smem constant byte address 0x4 - core index']
  #allocation1 [shape = 'u32[144,128]{1,0:T(1,128)}', space=vmem, size = 0x12000, scoped, tag = 'internal scratch']
  %s0 = inlined_call_operand.hbm [shape: f32[16,128], index: 0, kind: input, shape index: {}]
  %s1 = inlined_call_operand.hbm [shape: f32[16,128], index: 1, kind: input, shape index: {}]
  %s2 = inlined_call_operand.hbm [shape: f32[2,2,8,128], index: 2, kind: output, shape index: {}]
  %s3 = sld [smem:[#allocation0]]
  $region49: #{tpu_custom_call.1} parent=0
    _
  %s5 = ssub.s32 1, %s3
  %s6 = scalar_select 0, %s5, %s3
  $region1: #{tpu_custom_call.1} parent=0
    #allocation2 [shape = 'u8[8192]{0}', space=vmem, size = 0x2000, scoped, tag = 'input window, operand 0']
    #allocation3 [shape = 's32[2]{0}', space=sflag, size = 0x8, scoped, tag = 'scoped memory for tpu_custom_call.1']
    #allocation4 [shape = 's32[2]{0}', space=sflag, size = 0x8, scoped, tag = 'scoped memory for tpu_custom_call.1']
    #allocation5 [shape = 'u8[8192]{0}', space=vmem, size = 0x2000, scoped, tag = 'input window, operand 1']
    #allocation6 [shape = 's32[2]{0}', space=sflag, size = 0x8, scoped, tag = 'scoped memory for tpu_custom_call.1']
    #allocation7 [shape = 'u8[16384]{0}', space=vmem, size = 0x4000, scoped, tag = 'output window, operand 0']
    %7 = vsyncpa [#allocation3], 0
    %s8 = scalar_lea.sflag [#allocation3], 1
    %9 = vsyncpa %s8, 0
    %10 = vsyncpa [#allocation6], 0
    %s11 = scalar_lea.sflag [#allocation6], 1
    %12 = vsyncpa %s11, 0
    %13 = vsyncpa [#allocation4], 0
    %s14 = scalar_lea.sflag [#allocation4], 1
    %15 = vsyncpa %s14, 0
    loop: start=0, step=1, limit=4
    $region2: #{tpu_custom_call.1} parent=1 // loop_pre_header
      _
    $region3: #{tpu_custom_call.1} parent=1 // loop_header
      %s17 = sphi 0, %s21
      %p18 = scmp.ge.s32.totalorder %s17, 4
      %s27 = sphi 0, %s29
      %s30 = sphi 0, %s27
      %s31 = sphi 0, %s30
      %s47 = sphi 0, %s31
      %s53 = sphi 0, %s55
      %s56 = sphi 0, %s53
      %s57 = sphi 0, %s56
      %s73 = sphi 0, %s57
      %s79 = sphi 0, %s81
      %s82 = sphi 0, %s79
      %s83 = sphi 0, %s82
      %s99 = sphi 0, %s83
    $region4: #{tpu_custom_call.1} parent=1 // loop_header_branch
      %20 = sbr.rel (%p18) target = $region8
    $region5: #{tpu_custom_call.1} parent=1 // loop_body
      %s22 = ssub.s32 %s17, 1
      %s23 = ssub.s32 %s17, 2
      %s24 = sadd.s32 %s17, 1
      %s25 = ssub.s32 %s17, %s24
      %p26 = scmp.eq.s32.totalorder %s25, 0
      %s28 = sadd.s32 %s27, 1
      %s29 = scalar_select %p26, %s27, %s28
      %p32 = pneg %p26
      %p33 = scmp.eq.s32.totalorder %s17, 1
      %p34 = por %p32, %p33
      %p35 = scmp.ne.s32.totalorder %s27, %s30
      %p36 = scmp.eq.s32.totalorder %s17, 0
      %p37 = por %p35, %p36
      %p38 = scmp.ne.s32.totalorder %s27, %s30
      %p39 = scmp.eq.s32.totalorder %s22, 1
      %p40 = por %p38, %p39
      %p41 = scmp.ne.s32.totalorder %s30, %s31
      %p42 = scmp.eq.s32.totalorder %s22, 0
      %p43 = por %p41, %p42
      %p44 = scmp.ne.s32.totalorder %s30, %s31
      %p45 = scmp.eq.s32.totalorder %s23, 1
      %p46 = por %p44, %p45
      %p48 = scmp.ne.s32.totalorder %s31, %s47
      %p49 = scmp.eq.s32.totalorder %s23, 0
      %p50 = por %p48, %p49
      %s51 = ssub.s32 %s17, %s24
      %p52 = scmp.eq.s32.totalorder %s51, 0
      %s54 = sadd.s32 %s53, 1
      %s55 = scalar_select %p52, %s53, %s54
      %p58 = pneg %p52
      %p59 = scmp.eq.s32.totalorder %s17, 1
      %p60 = por %p58, %p59
      %p61 = scmp.ne.s32.totalorder %s53, %s56
      %p62 = scmp.eq.s32.totalorder %s17, 0
      %p63 = por %p61, %p62
      %p64 = scmp.ne.s32.totalorder %s53, %s56
      %p65 = scmp.eq.s32.totalorder %s22, 1
      %p66 = por %p64, %p65
      %p67 = scmp.ne.s32.totalorder %s56, %s57
      %p68 = scmp.eq.s32.totalorder %s22, 0
      %p69 = por %p67, %p68
      %p70 = scmp.ne.s32.totalorder %s56, %s57
      %p71 = scmp.eq.s32.totalorder %s23, 1
      %p72 = por %p70, %p71
      %p74 = scmp.ne.s32.totalorder %s57, %s73
      %p75 = scmp.eq.s32.totalorder %s23, 0
      %p76 = por %p74, %p75
      %s77 = ssub.s32 %s17, %s24
      %p78 = scmp.eq.s32.totalorder %s77, 0
      %s80 = sadd.s32 %s79, 1
      %s81 = scalar_select %p78, %s79, %s80
      %p84 = pneg %p78
      %p85 = scmp.eq.s32.totalorder %s17, 1
      %p86 = por %p84, %p85
      %p87 = scmp.ne.s32.totalorder %s79, %s82
      %p88 = scmp.eq.s32.totalorder %s17, 0
      %p89 = por %p87, %p88
      %p90 = scmp.ne.s32.totalorder %s79, %s82
      %p91 = scmp.eq.s32.totalorder %s22, 1
      %p92 = por %p90, %p91
      %p93 = scmp.ne.s32.totalorder %s82, %s83
      %p94 = scmp.eq.s32.totalorder %s22, 0
      %p95 = por %p93, %p94
      %p96 = scmp.ne.s32.totalorder %s82, %s83
      %p97 = scmp.eq.s32.totalorder %s23, 1
      %p98 = por %p96, %p97
      %p100 = scmp.ne.s32.totalorder %s83, %s99
      %p101 = scmp.eq.s32.totalorder %s23, 0
      %p102 = por %p100, %p101
      %p103 = scmp.le.s32.totalorder 1, %s17
      %p104 = scmp.lt.s32.totalorder %s17, 3
      %p105 = pnand %p103, %p104
      %p106 = pneg %p105
      // Predicated region
      $region9: #{tpu_custom_call.1} parent=5 // pred_check
        _
      $region10: #{tpu_custom_call.1} parent=5 // pred_check_branch
        %108 = sbr.rel (%p105) target = $region12
      $region11: #{tpu_custom_call.1} parent=5 // pred_region
        %s109 = ssub.s32 %s17, 1
      $region12: #{tpu_custom_call.1} parent=5 // pred_fallthru
        _
      %p110 = scmp.lt.s32.totalorder %s17, 2
      // Predicated region
      $region13: #{tpu_custom_call.1} parent=5 // pred_check
        %p111 = pneg %p110
      $region14: #{tpu_custom_call.1} parent=5 // pred_check_branch
        %113 = sbr.rel (%p111) target = $region16
      $region15: #{tpu_custom_call.1} parent=5 // pred_region
        // Predicated region
        $region17: #{tpu_custom_call.1} parent=15 // pred_check
          %p114 = pneg %p37
        $region18: #{tpu_custom_call.1} parent=15 // pred_check_branch
          %116 = sbr.rel (%p114) target = $region20
        $region19: #{tpu_custom_call.1} parent=15 // pred_region
          %s117 = sand.u32 %s27, 1
          %s118 = scalar_lea.sflag [#allocation3], %s117
          %s119 = sand.u32 %s27, 1
          %s120 = smul.addr %s119, 8
          %s121 = scalar_lea.vmem [#allocation2], %s120
          %s123 = ssub.s32 128, 128
          %124 = vsyncadd %s118, %s123
          %s125 = smul.addr %s17, 128
          %s126 = scalar_lea.hbm %s0, %s125
          %s128 = sshll.u32 %s121, 4
          %s129 = int_to_ptr.vmem [resolvable:$true] %s128
          %131 = dma.hbm_to_vmem [thread:$0]  %s126, 128, %s129, %s118
        $region20: #{tpu_custom_call.1} parent=15 // pred_fallthru
          _
        // Predicated region
        $region21: #{tpu_custom_call.1} parent=15 // pred_check
          %p132 = pneg %p63
        $region22: #{tpu_custom_call.1} parent=15 // pred_check_branch
          %134 = sbr.rel (%p132) target = $region24
        $region23: #{tpu_custom_call.1} parent=15 // pred_region
          %s135 = sand.u32 %s53, 1
          %s136 = scalar_lea.sflag [#allocation6], %s135
          %s137 = sand.u32 %s53, 1
          %s138 = smul.addr %s137, 8
          %s139 = scalar_lea.vmem [#allocation5], %s138
          %s141 = ssub.s32 128, 128
          %142 = vsyncadd %s136, %s141
          %s143 = smul.addr %s17, 128
          %s144 = scalar_lea.hbm %s1, %s143
          %s146 = sshll.u32 %s139, 4
          %s147 = int_to_ptr.vmem [resolvable:$true] %s146
          %149 = dma.hbm_to_vmem [thread:$0]  %s144, 128, %s147, %s136
        $region24: #{tpu_custom_call.1} parent=15 // pred_fallthru
          _
      $region16: #{tpu_custom_call.1} parent=5 // pred_fallthru
        _
      %p150 = scmp.le.s32.totalorder 1, %s17
      %p151 = scmp.lt.s32.totalorder %s17, 3
      %p152 = pnand %p150, %p151
      %p153 = pneg %p152
      // Predicated region
      $region25: #{tpu_custom_call.1} parent=5 // pred_check
        _
      $region26: #{tpu_custom_call.1} parent=5 // pred_check_branch
        %155 = sbr.rel (%p152) target = $region28
      $region27: #{tpu_custom_call.1} parent=5 // pred_region
        %s156 = ssub.s32 %s17, 1
        %s157 = sand.u32 %s30, 1
        %s158 = scalar_lea.sflag [#allocation3], %s157
        %s159 = sand.u32 %s30, 1
        %s160 = smul.addr %s159, 8
        %s161 = scalar_lea.vmem [#allocation2], %s160
        // Predicated region
        $region29: #{tpu_custom_call.1} parent=27 // pred_check
          %p162 = pneg %p43
        $region30: #{tpu_custom_call.1} parent=27 // pred_check_branch
          %164 = sbr.rel (%p162) target = $region32
        $region31: #{tpu_custom_call.1} parent=27 // pred_region
          %165 = dma.done %s158, 128
        $region32: #{tpu_custom_call.1} parent=27 // pred_fallthru
          _
        %s166 = sand.u32 %s56, 1
        %s167 = scalar_lea.sflag [#allocation6], %s166
        %s168 = sand.u32 %s56, 1
        %s169 = smul.addr %s168, 8
        %s170 = scalar_lea.vmem [#allocation5], %s169
        // Predicated region
        $region33: #{tpu_custom_call.1} parent=27 // pred_check
          %p171 = pneg %p69
        $region34: #{tpu_custom_call.1} parent=27 // pred_check_branch
          %173 = sbr.rel (%p171) target = $region36
        $region35: #{tpu_custom_call.1} parent=27 // pred_region
          %174 = dma.done %s167, 128
        $region36: #{tpu_custom_call.1} parent=27 // pred_fallthru
          _
        %s175 = sand.u32 %s30, 1
        %s176 = scalar_lea.sflag [#allocation3], %s175
        %s177 = sand.u32 %s30, 1
        %s178 = smul.addr %s177, 8
        %s179 = scalar_lea.vmem [#allocation2], %s178
        %p180 = pneg %p43
        %p181 = pneg %p40
        %s182 = sand.u32 %s56, 1
        %s183 = scalar_lea.sflag [#allocation6], %s182
        %s184 = sand.u32 %s56, 1
        %s185 = smul.addr %s184, 8
        %s186 = scalar_lea.vmem [#allocation5], %s185
        %p187 = pneg %p69
        %p188 = pneg %p66
        %p189 = pneg %p95
        %p190 = pneg %p92
        %s191 = sand.u32 %s82, 1
        %s192 = scalar_lea.sflag [#allocation4], %s191
        %s193 = sand.u32 %s82, 1
        %s194 = smul.addr %s193, 16
        %s195 = scalar_lea.vmem [#allocation7], %s194
        %v196 = vld [vmem:[%s161] sm:$0xff]
        %v197 = vld [vmem:[%s170] sm:$0xff]
        %v198 = vmul.f32 %v196, %v197
        %v199 = vadd.f32 %v196, %v197
        %v200 = vadd.f32 %v198, 0.0
        %201 = vst [vmem:[%s195] sm:$0xff] %v200
        %v202 = vadd.f32 %v199, 0.0
        %s203 = scalar_lea.vmem %s195, 8 [#allocation7]
        %204 = vst [vmem:[%s203] sm:$0xff] %v202
        %s205 = sand.u32 %s82, 1
        %s206 = scalar_lea.sflag [#allocation4], %s205
        %s207 = sand.u32 %s82, 1
        %s208 = smul.addr %s207, 16
        %s209 = scalar_lea.vmem [#allocation7], %s208
        // Predicated region
        $region37: #{tpu_custom_call.1} parent=27 // pred_check
          %p210 = pneg %p92
        $region38: #{tpu_custom_call.1} parent=27 // pred_check_branch
          %212 = sbr.rel (%p210) target = $region40
        $region39: #{tpu_custom_call.1} parent=27 // pred_region
          %s214 = ssub.s32 256, 256
          %215 = vsyncadd %s206, %s214
          %s216 = smul.addr %s22, 2
          %s217 = smul.addr %s216, 128
          %s218 = scalar_lea.hbm %s2, %s217
          %s219 = sshll.u32 %s209, 4
          %s220 = int_to_ptr.vmem [resolvable:$true] %s219
          %225 = dma.vmem_to_hbm [thread:$0]  %s220, 256, %s218, %s206, 128, 128, 8
        $region40: #{tpu_custom_call.1} parent=27 // pred_fallthru
          _
      $region28: #{tpu_custom_call.1} parent=5 // pred_fallthru
        _
      %p226 = scmp.le.s32.totalorder 2, %s17
      // Predicated region
      $region41: #{tpu_custom_call.1} parent=5 // pred_check
        %p227 = pneg %p226
      $region42: #{tpu_custom_call.1} parent=5 // pred_check_branch
        %229 = sbr.rel (%p227) target = $region44
      $region43: #{tpu_custom_call.1} parent=5 // pred_region
        %s230 = ssub.s32 %s17, 2
        // Predicated region
        $region45: #{tpu_custom_call.1} parent=43 // pred_check
          %p231 = pneg %p98
        $region46: #{tpu_custom_call.1} parent=43 // pred_check_branch
          %233 = sbr.rel (%p231) target = $region48
        $region47: #{tpu_custom_call.1} parent=43 // pred_region
          %s234 = sand.u32 %s83, 1
          %s235 = scalar_lea.sflag [#allocation4], %s234
          %s236 = sand.u32 %s83, 1
          %s237 = smul.addr %s236, 16
          %s238 = scalar_lea.vmem [#allocation7], %s237
          %239 = dma.done %s235, 256
        $region48: #{tpu_custom_call.1} parent=43 // pred_fallthru
          _
      $region44: #{tpu_custom_call.1} parent=5 // pred_fallthru
        _
    $region6: #{tpu_custom_call.1} parent=1 // loop_footer
      %s21 = sadd.s32 1, %s17
    $region7: #{tpu_custom_call.1} parent=1 // loop_footer_branch
      %16 = sbr.rel target = $region3
    $region8: #{tpu_custom_call.1} parent=1 // loop_exit
      _
    %240 = vsyncpa [#allocation3], 1
    %s241 = scalar_lea.sflag [#allocation3], 1
    %242 = vsyncpa %s241, 1
    %243 = vsyncpa [#allocation6], 1
    %s244 = scalar_lea.sflag [#allocation6], 1
    %245 = vsyncpa %s244, 1
    %246 = vsyncpa [#allocation4], 1
    %s247 = scalar_lea.sflag [#allocation4], 1
    %248 = vsyncpa %s247, 1

</llo_original>
